<compile_context>
chip_gen: v7x
topology: tpu7x:2x2x1
jax: 0.10.0
libtpu: 0.0.40
codegen_flags: <defaults>
</compile_context>

<pallas_src>
import functools

import jax
import jax.numpy as jnp
from jax.experimental import pallas as pl
from jax.experimental.pallas import tpu as pltpu

_LANE = 128
_SUBLANE = 8
_MXU = 256  # MXU height on v6e/v7x (also a multiple of v5e's 128)


def _round_up(v, m):
    return ((v + m - 1) // m) * m


def _block_bytes(rows, cols, dtype):
    """Physical VMEM bytes of one (rows, cols) block (lane/sublane padded)."""
    it = jnp.dtype(dtype).itemsize
    sub = _SUBLANE * max(1, 4 // it)  # packed sublane height: 8 f32 / 16 bf16 / 32 int8
    return _round_up(max(rows, 1), sub) * _round_up(max(cols, 1), _LANE) * it


def _vmem_budget():
    """(tile budget bytes, vmem_limit_bytes) derived from the chip's physical VMEM."""
    capacity = 64 * 1024 * 1024  # conservative fallback = v7x per-TC VMEM
    try:
        capacity = int(pltpu.get_tpu_info().vmem_capacity_bytes)
    except Exception:
        pass
    budget = capacity // 2                       # ~64 MiB on v5e/v6e, ~32 MiB on v7x
    limit = min(capacity - 16 * 1024 * 1024, 100 * 1024 * 1024)
    limit = max(limit, budget + 8 * 1024 * 1024)
    return budget, limit


def _choose_tiles(m, k, n, in_dtype, out_dtype, budget, block_rows):
    """Pick (tm, tk, tn).

    Priority: large row tiles (snapped to the MXU height, floor 256 when M allows),
    fully resident weight; N-panel the weight before K-tiling; shrink tm below 256
    only as a last resort; hard error if nothing fits the VMEM budget.
    """
    m8 = m if m <= _SUBLANE else _round_up(m, _SUBLANE)
    tm_full = min(block_rows, m8)
    if tm_full >= _MXU:
        tm_full = (tm_full // _MXU) * _MXU       # snap to MXU height
    tm_main = [tm_full] + [t for t in (2048, 1024, 512, 256) if t < tm_full]
    tm_tail = [t for t in (128, 64, 32, 16, 8) if t < tm_main[-1]]

    tn_opts = [n] + [t for t in (2048, 1024, 512, 256, 128) if t < n]
    tk_opts = [k] + [t for t in (2048, 1024, 512, 256, 128) if t < k]

    slack = 2 * 1024 * 1024  # Mosaic internal scratch / headroom

    def fits(tm, tk, tn):
        need = (2 * _block_bytes(tm, tk, in_dtype)       # x tile (double-buffered)
                + 2 * _block_bytes(tk, tn, in_dtype)     # weight panel (double-buffered)
                + 2 * _block_bytes(1, tn, jnp.float32)   # bias panel
                + 2 * _block_bytes(tm, tn, out_dtype)    # output tile
                + _block_bytes(tm, tn, jnp.float32))     # f32 accumulator scratch
        return need + slack <= budget

    for tm_opts in (tm_main, tm_tail):
        for tk in tk_opts:              # keep K un-tiled as long as possible
            for tn in tn_opts:          # ...and N-panel the weight before K-tiling
                for tm in tm_opts:
                    if fits(tm, tk, tn):
                        return tm, tk, tn
    raise ValueError(
        f"dense_relu: no (tm, tk, tn) tiling of (m={m}, k={k}, n={n}, "
        f"dtype={jnp.dtype(in_dtype).name}) fits the {budget >> 20} MiB VMEM budget")


def _dense_relu_kernel(x_ref, w_ref, b_ref, o_ref, acc_ref, *, k_rem):
    kk = pl.program_id(2)
    nk = pl.num_programs(2)

    @pl.when(kk == 0)
    def _init():
        acc_ref[...] = jnp.zeros_like(acc_ref)

    x = x_ref[...]
    w = w_ref[...]
    if k_rem:
        # K is tiled and its last block is ragged: zero the out-of-range K slice of
        # both operands (OOB block contents are unspecified and would corrupt the
        # reduction).  Static branch: compiled only when K % tk != 0.
        tk = x.shape[1]
        valid = jnp.where(kk == nk - 1, k_rem, tk)
        col = jax.lax.broadcasted_iota(jnp.int32, x.shape, 1)
        x = jnp.where(col < valid, x, jnp.zeros_like(x))
        row = jax.lax.broadcasted_iota(jnp.int32, w.shape, 0)
        w = jnp.where(row < valid, w, jnp.zeros_like(w))

    acc_ref[...] += jnp.dot(x, w, preferred_element_type=jnp.float32)

    @pl.when(kk == nk - 1)
    def _finalize():
        out = acc_ref[...] + b_ref[...].astype(jnp.float32)   # (tm,tn) + (1,tn)
        o_ref[...] = jnp.maximum(out, 0.0).astype(o_ref.dtype)


def prepare_dense_params(weight, bias, compute_dtype=jnp.bfloat16):
    """One-time parameter prep (hoist out of the per-call path).

    weight: (units, last_dim) in PyTorch nn.Linear layout; bias: (units,) or None.
    Returns (w_t, b2d): weight transposed to (last_dim, units) in the kernel's
    matmul dtype, bias as (1, units) f32.  Doing this once at load time avoids
    re-materialising a transposed/cast HBM copy of the weight on every call.
    """
    units, last_dim = weight.shape
    w_t = jnp.asarray(weight).T
    if compute_dtype is not None:
        w_t = w_t.astype(compute_dtype)
    if bias is None:
        b2d = jnp.zeros((1, units), jnp.float32)
    else:
        b2d = jnp.asarray(bias).reshape(1, units).astype(jnp.float32)
    return w_t, b2d


def dense_relu_apply(x, w_t, b2d, *, block_rows=1024, interpret=False):
    """ReLU(x @ w_t + b2d) with prepared params (see prepare_dense_params)."""
    *lead, last_dim = x.shape
    k, n = w_t.shape
    if last_dim != k:
        raise ValueError(f"last dim of x ({last_dim}) != weight in-features ({k})")
    m = 1
    for d in lead:
        m *= d
    m = max(m, 1)

    out_dtype = x.dtype
    x2d = x.reshape(m, k)
    if x2d.dtype != w_t.dtype:
        # Under jit this convert fuses with x's producer; stand-alone it is one
        # extra elementwise pass over x.
        x2d = x2d.astype(w_t.dtype)

    budget, vmem_limit = _vmem_budget()
    tm, tk, tn = _choose_tiles(m, k, n, x2d.dtype, out_dtype, budget, block_rows)

    # v7x has 2 TensorCores: make sure the parallel grid has >= 2 steps so both get
    # work under dimension_semantics=("parallel", ...).  Harmless on v5e/v6e.
    if pl.cdiv(m, tm) * pl.cdiv(n, tn) < 2 and m > _SUBLANE:
        tm = _round_up((m + 1) // 2, _SUBLANE)

    grid = (pl.cdiv(n, tn), pl.cdiv(m, tm), pl.cdiv(k, tk))
    n_panels = grid[0]

    in_it = jnp.dtype(x2d.dtype).itemsize
    out_it = jnp.dtype(out_dtype).itemsize
    cost = pl.CostEstimate(
        flops=2 * m * k * n,
        transcendentals=0,
        bytes_accessed=(m * k * in_it * n_panels + k * n * in_it
                        + n * 4 + m * n * out_it),
    )

    kernel = functools.partial(_dense_relu_kernel, k_rem=k % tk)

    out2d = pl.pallas_call(
        kernel,
        out_shape=jax.ShapeDtypeStruct((m, n), out_dtype),
        grid_spec=pltpu.PrefetchScalarGridSpec(
            num_scalar_prefetch=0,
            grid=grid,                                              # (n_panels, row_tiles, k_tiles)
            in_specs=[
                pl.BlockSpec((tm, tk), lambda j, i, kk: (i, kk)),   # streamed x tiles
                pl.BlockSpec((tk, tn), lambda j, i, kk: (kk, j)),   # weight panel (resident across rows)
                pl.BlockSpec((1, tn), lambda j, i, kk: (0, j)),     # bias panel
            ],
            out_specs=pl.BlockSpec((tm, tn), lambda j, i, kk: (i, j)),
            scratch_shapes=[pltpu.VMEM((tm, tn), jnp.float32)],     # f32 accumulator
        ),
        compiler_params=pltpu.CompilerParams(
            dimension_semantics=("parallel", "parallel", "arbitrary"),
            vmem_limit_bytes=vmem_limit,
        ),
        cost_estimate=cost,
        interpret=interpret,
    )(x2d, w_t, b2d)

    return out2d.reshape(*lead, n)


def dense_nested_tensors(x, weight, bias, *, compute_dtype=jnp.bfloat16, block_rows=1024):
    """DenseNestedTensors forward: ReLU(nn.Linear(last_dim -> units)(x)).

    weight: (units, last_dim) PyTorch layout; bias: (units,).
    compute_dtype=jnp.bfloat16 (default) halves matmul-input HBM traffic (f32 MXU
    accumulate, f32 bias/ReLU epilogue); pass jnp.float32 for exact f32 parity.
    NOTE: this convenience wrapper re-transposes/casts the weight every call (one
    HBM copy of the weight); for inference loops call prepare_dense_params() once
    and use dense_relu_apply().
    """
    w_t, b2d = prepare_dense_params(weight, bias, compute_dtype=compute_dtype)
    return dense_relu_apply(x, w_t, b2d, block_rows=block_rows)


if __name__ == "__main__":
    key = jax.random.PRNGKey(0)
    kx, kw, kb, kx2, kw2, kb2 = jax.random.split(key, 6)

    # Small shapes consistent with the module.
    batch, seq, last_dim, units = 2, 8, 32, 128
    x = jax.random.normal(kx, (batch, seq, last_dim), dtype=jnp.float32)
    bound = 1.0 / (last_dim ** 0.5)
    weight = jax.random.uniform(kw, (units, last_dim), jnp.float32, -bound, bound)
    bias = jax.random.uniform(kb, (units,), jnp.float32, -bound, bound)

    ref = jnp.maximum(jnp.einsum("bsk,nk->bsn", x, weight) + bias, 0.0)

    # Default path: bf16 matmul inputs, f32 accumulate/epilogue.
    out_bf16 = jax.block_until_ready(dense_nested_tensors(x, weight, bias))
    assert out_bf16.shape == ref.shape and out_bf16.dtype == x.dtype
    assert jnp.allclose(out_bf16, ref, atol=7.5e-2, rtol=5e-2)

    # Exact-parity path (f32 end to end, prepared-params API).
    w_t, b2d = prepare_dense_params(weight, bias, compute_dtype=jnp.float32)
    out_f32 = jax.block_until_ready(dense_relu_apply(x, w_t, b2d))
    assert jnp.allclose(out_f32, ref, atol=1e-5, rtol=1e-5)

    # Odd shapes: exercises the ragged last row-tile (no wrapper-side padding).
    b2_, s2_, k2_, n2_ = 2, 7, 48, 200
    x2 = jax.random.normal(kx2, (b2_, s2_, k2_), dtype=jnp.float32)
    bound2 = 1.0 / (k2_ ** 0.5)
    weight2 = jax.random.uniform(kw2, (n2_, k2_), jnp.float32, -bound2, bound2)
    bias2 = jax.random.uniform(kb2, (n2_,), jnp.float32, -bound2, bound2)
    ref2 = jnp.maximum(jnp.einsum("bsk,nk->bsn", x2, weight2) + bias2, 0.0)
    out2 = jax.block_until_ready(
        dense_nested_tensors(x2, weight2, bias2, compute_dtype=jnp.float32))
    assert out2.shape == ref2.shape
    assert jnp.allclose(out2, ref2, atol=1e-4, rtol=1e-4)

    print("KERNEL_OK")
</pallas_src>

<mosaic_0001>
module attributes {stable_mosaic.version = 11 : i64} {
  func.func @_dense_relu_kernel(%arg0: i32, %arg1: i32, %arg2: i32, %arg3: memref<8x32xbf16, #tpu.memory_space<vmem>>, %arg4: memref<32x128xbf16, #tpu.memory_space<vmem>>, %arg5: memref<1x128xf32, #tpu.memory_space<vmem>>, %arg6: memref<8x128xf32, #tpu.memory_space<vmem>>, %arg7: memref<8x128xf32, #tpu.memory_space<vmem>>) attributes {dimension_semantics = [#tpu.dimension_semantics<parallel>, #tpu.dimension_semantics<parallel>, #tpu.dimension_semantics<arbitrary>], iteration_bounds = array<i64: 1, 2, 1>, scalar_prefetch = 0 : i64, scratch_operands = 1 : i64, tpu.core_type = #tpu.core_type<tc>, window_params = [{transform_indices = @transform_0, window_bounds = array<i64: 8, 32>}, {transform_indices = @transform_1, window_bounds = array<i64: 32, 128>}, {transform_indices = @transform_2, window_bounds = array<i64: 1, 128>}, {transform_indices = @transform_3, window_bounds = array<i64: 8, 128>}]} {
    %c0_i32 = arith.constant 0 : i32
    %0 = arith.cmpi eq, %arg2, %c0_i32 : i32
    %1 = arith.extui %0 : i1 to i32
    %c0_i32_0 = arith.constant 0 : i32
    %2 = arith.cmpi ne, %1, %c0_i32_0 : i32
    scf.if %2 {
      %cst_10 = arith.constant 0.000000e+00 : f32
      %12 = vector.broadcast %cst_10 : f32 to vector<8x128xf32>
      %c0_11 = arith.constant 0 : index
      %c0_12 = arith.constant 0 : index
      %13 = vector.load %arg7[%c0_11, %c0_12] : memref<8x128xf32, #tpu.memory_space<vmem>>, vector<8x128xf32>
      tpu.vector_store %arg7[%c0_11, %c0_12], %12 {strides = array<i32>} : memref<8x128xf32, #tpu.memory_space<vmem>>, vector<8x128xf32>,
    } else {
    }
    %c0 = arith.constant 0 : index
    %c0_1 = arith.constant 0 : index
    %3 = vector.load %arg3[%c0, %c0_1] : memref<8x32xbf16, #tpu.memory_space<vmem>>, vector<8x32xbf16>
    %c0_2 = arith.constant 0 : index
    %c0_3 = arith.constant 0 : index
    %4 = vector.load %arg4[%c0_2, %c0_3] : memref<32x128xbf16, #tpu.memory_space<vmem>>, vector<32x128xbf16>
    %c0_4 = arith.constant 0 : index
    %c0_5 = arith.constant 0 : index
    %5 = vector.load %arg7[%c0_4, %c0_5] : memref<8x128xf32, #tpu.memory_space<vmem>>, vector<8x128xf32>
    %cst = arith.constant dense<0.000000e+00> : vector<8x128xf32>
    %6 = tpu.matmul %3, %4, %cst {dimension_numbers = #tpu.dot_dimension_numbers<[1], [0], [0], [1], [0, 0, 1, 1], [], []>} : vector<8x32xbf16>, vector<32x128xbf16>, vector<8x128xf32> -> vector<8x128xf32>
    %7 = arith.addf %5, %6 : vector<8x128xf32>
    %c0_6 = arith.constant 0 : index
    %c0_7 = arith.constant 0 : index
    %8 = vector.load %arg7[%c0_6, %c0_7] : memref<8x128xf32, #tpu.memory_space<vmem>>, vector<8x128xf32>
    tpu.vector_store %arg7[%c0_6, %c0_7], %7 {strides = array<i32>} : memref<8x128xf32, #tpu.memory_space<vmem>>, vector<8x128xf32>,
    %c0_i32_8 = arith.constant 0 : i32
    %9 = arith.cmpi eq, %arg2, %c0_i32_8 : i32
    %10 = arith.extui %9 : i1 to i32
    %c0_i32_9 = arith.constant 0 : i32
    %11 = arith.cmpi ne, %10, %c0_i32_9 : i32
    scf.if %11 {
      %c0_10 = arith.constant 0 : index
      %c0_11 = arith.constant 0 : index
      %12 = vector.load %arg7[%c0_10, %c0_11] : memref<8x128xf32, #tpu.memory_space<vmem>>, vector<8x128xf32>
      %c0_12 = arith.constant 0 : index
      %c0_13 = arith.constant 0 : index
      %13 = vector.load %arg5[%c0_12, %c0_13] : memref<1x128xf32, #tpu.memory_space<vmem>>, vector<1x128xf32>
      %14 = vector.broadcast %13 : vector<1x128xf32> to vector<8x128xf32>
      %15 = arith.addf %12, %14 : vector<8x128xf32>
      %cst_14 = arith.constant 0.000000e+00 : f32
      %16 = vector.broadcast %cst_14 : f32 to vector<8x128xf32>
      %17 = arith.maximumf %15, %16 : vector<8x128xf32>
      %c0_15 = arith.constant 0 : index
      %c0_16 = arith.constant 0 : index
      %18 = vector.load %arg6[%c0_15, %c0_16] : memref<8x128xf32, #tpu.memory_space<vmem>>, vector<8x128xf32>
      tpu.vector_store %arg6[%c0_15, %c0_16], %17 {strides = array<i32>} : memref<8x128xf32, #tpu.memory_space<vmem>>, vector<8x128xf32>,
    } else {
    }
    return
  }
  func.func @transform_0(%arg0: i32, %arg1: i32, %arg2: i32) -> (i32, i32) {
    %c0_i32 = arith.constant 0 : i32
    return %arg1, %arg2 : i32, i32
  }
  func.func @transform_1(%arg0: i32, %arg1: i32, %arg2: i32) -> (i32, i32) {
    %c0_i32 = arith.constant 0 : i32
    return %arg2, %arg0 : i32, i32
  }
  func.func @transform_2(%arg0: i32, %arg1: i32, %arg2: i32) -> (i32, i32) {
    %c0_i32 = arith.constant 0 : i32
    %c0_i32_0 = arith.constant 0 : i32
    return %c0_i32, %arg0 : i32, i32
  }
  func.func @transform_3(%arg0: i32, %arg1: i32, %arg2: i32) -> (i32, i32) {
    %c0_i32 = arith.constant 0 : i32
    return %arg1, %arg0 : i32, i32
  }
}

</mosaic_0001>

<llo_original>
// kernel: tpu_custom_call.1
$region0: #{tpu_custom_call.1}
  #allocation0 [shape = 'u32[]', space=smem, size = 0x4, offset = 0x4, fixed_abs, tag = 'smem constant byte address 0x4 - core index']
  #allocation1 [shape = 'u32[144,128]{1,0:T(1,128)}', space=vmem, size = 0x12000, scoped, tag = 'internal scratch']
  #allocation2 [shape = 'f32[8,128]{1,0:T(8,128)}', space=vmem, size = 0x1000, scoped, tag = 'scratch operand']
  %s0 = inlined_call_operand.hbm [shape: bf16[16,32], index: 0, kind: input, shape index: {}]
  %s1 = inlined_call_operand.hbm [shape: bf16[32,128], index: 1, kind: input, shape index: {}]
  %s2 = inlined_call_operand.vmem [shape: f32[1,128], index: 2, kind: input, shape index: {}]
  %s3 = inlined_call_operand.hbm [shape: f32[16,128], index: 3, kind: output, shape index: {}]
  %s4 = sld [smem:[#allocation0]]
  $region61: #{tpu_custom_call.1} parent=0
    _
  %s6 = ssub.s32 1, %s4
  %s7 = scalar_select 0, %s6, %s4
  $region1: #{tpu_custom_call.1} parent=0
    #allocation3 [shape = 'u8[4096]{0}', space=vmem, size = 0x1000, scoped, tag = 'input window, operand 0']
    #allocation4 [shape = 's32[2]{0}', space=sflag, size = 0x8, scoped, tag = 'scoped memory for tpu_custom_call.1']
    #allocation5 [shape = 's32[2]{0}', space=sflag, size = 0x8, scoped, tag = 'scoped memory for tpu_custom_call.1']
    #allocation6 [shape = 'u8[8192]{0}', space=vmem, size = 0x2000, scoped, tag = 'input window, operand 1, single buffered']
    #allocation7 [shape = 's32[1]{0}', space=sflag, size = 0x4, scoped, tag = 'scoped memory for tpu_custom_call.1']
    #allocation8 [shape = 'u8[8192]{0}', space=vmem, size = 0x2000, scoped, tag = 'output window, operand 0']
    %8 = vsyncpa [#allocation4], 0
    %s9 = scalar_lea.sflag [#allocation4], 1
    %10 = vsyncpa %s9, 0
    %11 = vsyncpa [#allocation7], 0
    %12 = vsyncpa [#allocation5], 0
    %s13 = scalar_lea.sflag [#allocation5], 1
    %14 = vsyncpa %s13, 0
    loop: start=0, step=1, limit=4
    $region2: #{tpu_custom_call.1} parent=1 // loop_pre_header
      _
    $region3: #{tpu_custom_call.1} parent=1 // loop_header
      %s16 = sphi 0, %s20
      %p17 = scmp.ge.s32.totalorder %s16, 4
      %s23 = sphi 0, %s42
      %s24 = sphi 0, %s38
      %s25 = sphi 0, %s34
      %s26 = sphi 0, %s23
      %s27 = sphi 0, %s24
      %s28 = sphi 0, %s25
      %s29 = sphi 0, %s26
      %s30 = sphi 0, %s27
      %s31 = sphi 0, %s28
      %s47 = sphi 0, %s49
      %s50 = sphi 0, %s47
      %s51 = sphi 0, %s50
      %s67 = sphi 0, %s51
      %s75 = sphi 0, %s77
      %s78 = sphi 0, %s75
      %s79 = sphi 0, %s78
      %s95 = sphi 0, %s79
      %s101 = sphi 0, %s103
      %s104 = sphi 0, %s101
      %s105 = sphi 0, %s104
      %s121 = sphi 0, %s105
      %s129 = sphi 0, %s131
      %s132 = sphi 0, %s129
      %s133 = sphi 0, %s132
      %s149 = sphi 0, %s133
    $region4: #{tpu_custom_call.1} parent=1 // loop_header_branch
      %19 = sbr.rel (%p17) target = $region8
    $region5: #{tpu_custom_call.1} parent=1 // loop_body
      %s21 = ssub.s32 %s16, 1
      %s22 = ssub.s32 %s16, 2
      %s32 = sadd.s32 1, %s25
      %p33 = scmp.ge.s32.totalorder %s32, 1
      %s34 = scalar_select %p33, 0, %s32
      %s35 = sadd.s32 1, %s24
      %s36 = scalar_select %p33, %s35, %s24
      %p37 = scmp.ge.s32.totalorder %s36, 2
      %s38 = scalar_select %p37, 0, %s36
      %s39 = sadd.s32 1, %s23
      %s40 = scalar_select %p37, %s39, %s23
      %p41 = scmp.ge.s32.totalorder %s40, 1
      %s42 = scalar_select %p41, 0, %s40
      %s43 = ssub.s32 %s24, %s38
      %s44 = ssub.s32 %s25, %s34
      %s45 = sor.u32 %s43, %s44
      %p46 = scmp.eq.s32.totalorder %s45, 0
      %s48 = sadd.s32 %s47, 1
      %s49 = scalar_select %p46, %s47, %s48
      %p52 = pneg %p46
      %p53 = scmp.eq.s32.totalorder %s16, 1
      %p54 = por %p52, %p53
      %p55 = scmp.ne.s32.totalorder %s47, %s50
      %p56 = scmp.eq.s32.totalorder %s16, 0
      %p57 = por %p55, %p56
      %p58 = scmp.ne.s32.totalorder %s47, %s50
      %p59 = scmp.eq.s32.totalorder %s21, 1
      %p60 = por %p58, %p59
      %p61 = scmp.ne.s32.totalorder %s50, %s51
      %p62 = scmp.eq.s32.totalorder %s21, 0
      %p63 = por %p61, %p62
      %p64 = scmp.ne.s32.totalorder %s50, %s51
      %p65 = scmp.eq.s32.totalorder %s22, 1
      %p66 = por %p64, %p65
      %p68 = scmp.ne.s32.totalorder %s51, %s67
      %p69 = scmp.eq.s32.totalorder %s22, 0
      %p70 = por %p68, %p69
      %s71 = ssub.s32 %s25, %s34
      %s72 = ssub.s32 %s23, %s42
      %s73 = sor.u32 %s71, %s72
      %p74 = scmp.eq.s32.totalorder %s73, 0
      %s76 = sadd.s32 %s75, 1
      %s77 = scalar_select %p74, %s75, %s76
      %p80 = pneg %p74
      %p81 = scmp.eq.s32.totalorder %s16, 1
      %p82 = por %p80, %p81
      %p83 = scmp.ne.s32.totalorder %s75, %s78
      %p84 = scmp.eq.s32.totalorder %s16, 0
      %p85 = por %p83, %p84
      %p86 = scmp.ne.s32.totalorder %s75, %s78
      %p87 = scmp.eq.s32.totalorder %s21, 1
      %p88 = por %p86, %p87
      %p89 = scmp.ne.s32.totalorder %s78, %s79
      %p90 = scmp.eq.s32.totalorder %s21, 0
      %p91 = por %p89, %p90
      %p92 = scmp.ne.s32.totalorder %s78, %s79
      %p93 = scmp.eq.s32.totalorder %s22, 1
      %p94 = por %p92, %p93
      %p96 = scmp.ne.s32.totalorder %s79, %s95
      %p97 = scmp.eq.s32.totalorder %s22, 0
      %p98 = por %p96, %p97
      %s99 = ssub.s32 %s23, %s42
      %p100 = scmp.eq.s32.totalorder %s99, 0
      %s102 = sadd.s32 %s101, 1
      %s103 = scalar_select %p100, %s101, %s102
      %p106 = pneg %p100
      %p107 = scmp.eq.s32.totalorder %s16, 1
      %p108 = por %p106, %p107
      %p109 = scmp.ne.s32.totalorder %s101, %s104
      %p110 = scmp.eq.s32.totalorder %s16, 0
      %p111 = por %p109, %p110
      %p112 = scmp.ne.s32.totalorder %s101, %s104
      %p113 = scmp.eq.s32.totalorder %s21, 1
      %p114 = por %p112, %p113
      %p115 = scmp.ne.s32.totalorder %s104, %s105
      %p116 = scmp.eq.s32.totalorder %s21, 0
      %p117 = por %p115, %p116
      %p118 = scmp.ne.s32.totalorder %s104, %s105
      %p119 = scmp.eq.s32.totalorder %s22, 1
      %p120 = por %p118, %p119
      %p122 = scmp.ne.s32.totalorder %s105, %s121
      %p123 = scmp.eq.s32.totalorder %s22, 0
      %p124 = por %p122, %p123
      %s125 = ssub.s32 %s24, %s38
      %s126 = ssub.s32 %s23, %s42
      %s127 = sor.u32 %s125, %s126
      %p128 = scmp.eq.s32.totalorder %s127, 0
      %s130 = sadd.s32 %s129, 1
      %s131 = scalar_select %p128, %s129, %s130
      %p134 = pneg %p128
      %p135 = scmp.eq.s32.totalorder %s16, 1
      %p136 = por %p134, %p135
      %p137 = scmp.ne.s32.totalorder %s129, %s132
      %p138 = scmp.eq.s32.totalorder %s16, 0
      %p139 = por %p137, %p138
      %p140 = scmp.ne.s32.totalorder %s129, %s132
      %p141 = scmp.eq.s32.totalorder %s21, 1
      %p142 = por %p140, %p141
      %p143 = scmp.ne.s32.totalorder %s132, %s133
      %p144 = scmp.eq.s32.totalorder %s21, 0
      %p145 = por %p143, %p144
      %p146 = scmp.ne.s32.totalorder %s132, %s133
      %p147 = scmp.eq.s32.totalorder %s22, 1
      %p148 = por %p146, %p147
      %p150 = scmp.ne.s32.totalorder %s133, %s149
      %p151 = scmp.eq.s32.totalorder %s22, 0
      %p152 = por %p150, %p151
      %p153 = scmp.le.s32.totalorder 1, %s16
      %p154 = scmp.lt.s32.totalorder %s16, 3
      %p155 = pnand %p153, %p154
      %p156 = pneg %p155
      // Predicated region
      $region9: #{tpu_custom_call.1} parent=5 // pred_check
        _
      $region10: #{tpu_custom_call.1} parent=5 // pred_check_branch
        %158 = sbr.rel (%p155) target = $region12
      $region11: #{tpu_custom_call.1} parent=5 // pred_region
        %s159 = ssub.s32 %s16, 1
        // Predicated region
        $region13: #{tpu_custom_call.1} parent=11 // pred_check
          %p160 = pneg %p91
        $region14: #{tpu_custom_call.1} parent=11 // pred_check_branch
          %162 = sbr.rel (%p160) target = $region16
        $region15: #{tpu_custom_call.1} parent=11 // pred_region
          %s163 = smul.u32 4, %s28
          %s165 = ssub.s32 256, 256
          %166 = vsyncadd [#allocation7], %s165
          %s167 = sadd.s32 %s26, %s163
          %s168 = smul.addr %s167, 64
          %s169 = scalar_lea.hbm %s1, %s168
          %s170 = sshll.u32 [#allocation6], 4
          %s171 = int_to_ptr.vmem [resolvable:$true] %s170
          %176 = dma.hbm_to_vmem [thread:$0]  %s169, 256, %s171, [#allocation7], 64, 64, 4
        $region16: #{tpu_custom_call.1} parent=11 // pred_fallthru
          _
        // Predicated region
        $region17: #{tpu_custom_call.1} parent=11 // pred_check
          %p177 = pneg %p117
        $region18: #{tpu_custom_call.1} parent=11 // pred_check_branch
          %179 = sbr.rel (%p177) target = $region20
        $region19: #{tpu_custom_call.1} parent=11 // pred_region
          %p180 = scmp.lt.s32.totalorder %s26, 0
          %s181 = scalar_select %p180, %s26, 0
          %s182 = scalar_lea.vmem %s2, %s181
        $region20: #{tpu_custom_call.1} parent=11 // pred_fallthru
          _
      $region12: #{tpu_custom_call.1} parent=5 // pred_fallthru
        _
      %p183 = scmp.lt.s32.totalorder %s16, 2
      // Predicated region
      $region21: #{tpu_custom_call.1} parent=5 // pred_check
        %p184 = pneg %p183
      $region22: #{tpu_custom_call.1} parent=5 // pred_check_branch
        %186 = sbr.rel (%p184) target = $region24
      $region23: #{tpu_custom_call.1} parent=5 // pred_region
        // Predicated region
        $region25: #{tpu_custom_call.1} parent=23 // pred_check
          %p187 = pneg %p57
        $region26: #{tpu_custom_call.1} parent=23 // pred_check_branch
          %189 = sbr.rel (%p187) target = $region28
        $region27: #{tpu_custom_call.1} parent=23 // pred_region
          %s190 = sand.u32 %s47, 1
          %s191 = scalar_lea.sflag [#allocation4], %s190
          %s192 = sand.u32 %s47, 1
          %s193 = smul.addr %s192, 4
          %s194 = scalar_lea.vmem [#allocation3], %s193
          %s196 = ssub.s32 64, 64
          %197 = vsyncadd %s191, %s196
          %s198 = sadd.s32 %s25, %s24
          %s199 = smul.addr %s198, 64
          %s200 = scalar_lea.hbm %s0, %s199
          %s202 = sshll.u32 %s194, 4
          %s203 = int_to_ptr.vmem [resolvable:$true] %s202
          %205 = dma.hbm_to_vmem [thread:$0]  %s200, 64, %s203, %s191
        $region28: #{tpu_custom_call.1} parent=23 // pred_fallthru
          _
      $region24: #{tpu_custom_call.1} parent=5 // pred_fallthru
        _
      %p206 = scmp.le.s32.totalorder 1, %s16
      %p207 = scmp.lt.s32.totalorder %s16, 3
      %p208 = pnand %p206, %p207
      %p209 = pneg %p208
      // Predicated region
      $region29: #{tpu_custom_call.1} parent=5 // pred_check
        _
      $region30: #{tpu_custom_call.1} parent=5 // pred_check_branch
        %211 = sbr.rel (%p208) target = $region32
      $region31: #{tpu_custom_call.1} parent=5 // pred_region
        %s212 = ssub.s32 %s16, 1
        %s213 = sand.u32 %s50, 1
        %s214 = scalar_lea.sflag [#allocation4], %s213
        %s215 = sand.u32 %s50, 1
        %s216 = smul.addr %s215, 4
        %s217 = scalar_lea.vmem [#allocation3], %s216
        // Predicated region
        $region33: #{tpu_custom_call.1} parent=31 // pred_check
          %p218 = pneg %p63
        $region34: #{tpu_custom_call.1} parent=31 // pred_check_branch
          %220 = sbr.rel (%p218) target = $region36
        $region35: #{tpu_custom_call.1} parent=31 // pred_region
          %221 = dma.done %s214, 64
        $region36: #{tpu_custom_call.1} parent=31 // pred_fallthru
          _
        // Predicated region
        $region37: #{tpu_custom_call.1} parent=31 // pred_check
          %p222 = pneg %p91
        $region38: #{tpu_custom_call.1} parent=31 // pred_check_branch
          %224 = sbr.rel (%p222) target = $region40
        $region39: #{tpu_custom_call.1} parent=31 // pred_region
          %225 = dma.done [#allocation7], 256
        $region40: #{tpu_custom_call.1} parent=31 // pred_fallthru
          _
        %s226 = sand.u32 %s50, 1
        %s227 = scalar_lea.sflag [#allocation4], %s226
        %s228 = sand.u32 %s50, 1
        %s229 = smul.addr %s228, 4
        %s230 = scalar_lea.vmem [#allocation3], %s229
        %p231 = pneg %p63
        %p232 = pneg %p60
        %p233 = pneg %p91
        %p234 = pneg %p88
        %p235 = scmp.lt.s32.totalorder %s26, 0
        %s236 = scalar_select %p235, %s26, 0
        %s237 = scalar_lea.vmem %s2, %s236
        %p238 = pneg %p117
        %p239 = pneg %p114
        %p240 = pneg %p145
        %p241 = pneg %p142
        %s242 = sand.u32 %s132, 1
        %s243 = scalar_lea.sflag [#allocation5], %s242
        %s244 = sand.u32 %s132, 1
        %s245 = smul.addr %s244, 8
        %s246 = scalar_lea.vmem [#allocation8], %s245
        %s247 = smul.u32 4, %s28
        %p248 = scmp.lt.s32.totalorder %s26, 0
        %s249 = scalar_select %p248, %s26, 0
        %s250 = scalar_lea.vmem %s2, %s249
        %p252 = scmp.eq.s32.totalorder %s28, 0
        // Predicated region
        $region41: #{tpu_custom_call.1} parent=31 // pred_check
          %p253 = pneg %p252
        $region42: #{tpu_custom_call.1} parent=31 // pred_check_branch
          %255 = sbr.rel (%p253) target = $region44
        $region43: #{tpu_custom_call.1} parent=31 // pred_region
          %256 = vst [vmem:[#allocation2] sm:$0xff] 0.0
        $region44: #{tpu_custom_call.1} parent=31 // pred_fallthru
          _
        %v257 = vld [vmem:[%s217] sm:$0xf]
        %v258 = vld [vmem:[#allocation6] sm:$0xf]
        %v259 = vld [vmem:[#allocation6 + $0x4] sm:$0xf]
        %v260 = vld [vmem:[#allocation6 + $0x8] sm:$0xf]
        %v261 = vld [vmem:[#allocation6 + $0xc] sm:$0xf]
        %v262 = vld [vmem:[#allocation2] sm:$0xff]
        %v267 = vunpack.c.l.b16 %v258
        %v268 = vunpack.c.l.b16 %v259
        %v269 = vunpack.c.l.b16 %v260
        %v270 = vunpack.c.l.b16 %v261
        %v271 = vpack.c.b16 %v268, %v267
        %v272 = vpack.c.b16 %v270, %v269
        %vm275 = vcmask 261120
        %v277 = vsel %vm275, %v257, 0
        %279 = vmatprep.subr.bf16.mxu0 0
        %280 = vmatpush1.bf16.msra.mxu0 %v271
        %281 = vmatprep.subr.bf16.mxu0 0
        %282 = vmatpush1.bf16.msra.mxu0 %v272
        %283 = vmatprep.subr.bf16.mxu0 0
        %284 = vmatpush1.bf16.msra.mxu0 0
        %285 = vmatprep.subr.bf16.mxu0 0
        %286 = vmatpush1.bf16.msra.mxu0 0
        %287 = vmatprep.subr.bf16.mxu0 0
        %288 = vmatpush1.bf16.msra.mxu0 0
        %289 = vmatprep.subr.bf16.mxu0 0
        %290 = vmatpush1.bf16.msra.mxu0 0
        %291 = vmatprep.subr.bf16.mxu0 0
        %292 = vmatpush1.bf16.msra.mxu0 0
        %293 = vmatprep.subr.bf16.mxu0 0
        %294 = vmatpush1.bf16.msra.mxu0 0
        %295 = vmatprep.subr.bf16.mxu0 0
        %296 = vmatpush1.bf16.msra.mxu0 0
        %297 = vmatprep.subr.bf16.mxu0 0
        %298 = vmatpush1.bf16.msra.mxu0 0
        %299 = vmatprep.subr.bf16.mxu0 0
        %300 = vmatpush1.bf16.msra.mxu0 0
        %301 = vmatprep.subr.bf16.mxu0 0
        %302 = vmatpush1.bf16.msra.mxu0 0
        %303 = vmatprep.subr.bf16.mxu0 0
        %304 = vmatpush1.bf16.msra.mxu0 0
        %305 = vmatprep.subr.bf16.mxu0 0
        %306 = vmatpush1.bf16.msra.mxu0 0
        %307 = vmatprep.subr.bf16.mxu0 0
        %308 = vmatpush1.bf16.msra.mxu0 0
        %309 = vmatprep.subr.bf16.mxu0 0
        %310 = vmatpush1.bf16.msra.mxu0 0
        %311 = vmatprep.mubr.bf16.mxu0 0
        %312 = vmatmul.mubr.bf16.gmra.mrb[0].mxu0 %v277
        %v313 = vpop.f32.mrb[0].mxu0
        %v314 = vadd.f32 0.0, %v313
        %v315 = vpop.f32.mrb[0].mxu0
        %v316 = vpop.f32.mrb[0].mxu0
        %v317 = vpop.f32.mrb[0].mxu0
        %318 = vdwg.mxu0
        %v319 = vadd.f32 %v262, %v314
        %320 = vst [vmem:[#allocation2] sm:$0xff] %v319
        // Predicated region
        $region45: #{tpu_custom_call.1} parent=31 // pred_check
          %p321 = pneg %p252
        $region46: #{tpu_custom_call.1} parent=31 // pred_check_branch
          %323 = sbr.rel (%p321) target = $region48
        $region47: #{tpu_custom_call.1} parent=31 // pred_region
          %v324 = vld [vmem:[#allocation2] sm:$0xff]
          %v325 = vld [vmem:[%s250] sm:$0x1]
          %v327 = vlaneseq
          %v328 = vshrl.u32 %v327, 7
          %v329 = vsub.s32 0, %v328
          %v330 = vrot.slane %v325, %v329
          %v332 = vadd.f32 %v324, %v330
          %v333 = vmax.f32 %v332, 0.0
          %334 = vst [vmem:[%s246] sm:$0xff] %v333
        $region48: #{tpu_custom_call.1} parent=31 // pred_fallthru
          _
        %s335 = sand.u32 %s132, 1
        %s336 = scalar_lea.sflag [#allocation5], %s335
        %s337 = sand.u32 %s132, 1
        %s338 = smul.addr %s337, 8
        %s339 = scalar_lea.vmem [#allocation8], %s338
        // Predicated region
        $region49: #{tpu_custom_call.1} parent=31 // pred_check
          %p340 = pneg %p142
        $region50: #{tpu_custom_call.1} parent=31 // pred_check_branch
          %342 = sbr.rel (%p340) target = $region52
        $region51: #{tpu_custom_call.1} parent=31 // pred_region
          %s344 = ssub.s32 128, 128
          %345 = vsyncadd %s336, %s344
          %s346 = sadd.s32 %s26, %s27
          %s347 = smul.addr %s346, 128
          %s348 = scalar_lea.hbm %s3, %s347
          %s350 = sshll.u32 %s339, 4
          %s351 = int_to_ptr.vmem [resolvable:$true] %s350
          %353 = dma.vmem_to_hbm [thread:$0]  %s351, 128, %s348, %s336
        $region52: #{tpu_custom_call.1} parent=31 // pred_fallthru
          _
      $region32: #{tpu_custom_call.1} parent=5 // pred_fallthru
        _
      %p354 = scmp.le.s32.totalorder 2, %s16
      // Predicated region
      $region53: #{tpu_custom_call.1} parent=5 // pred_check
        %p355 = pneg %p354
      $region54: #{tpu_custom_call.1} parent=5 // pred_check_branch
        %357 = sbr.rel (%p355) target = $region56
      $region55: #{tpu_custom_call.1} parent=5 // pred_region
        %s358 = ssub.s32 %s16, 2
        // Predicated region
        $region57: #{tpu_custom_call.1} parent=55 // pred_check
          %p359 = pneg %p148
        $region58: #{tpu_custom_call.1} parent=55 // pred_check_branch
          %361 = sbr.rel (%p359) target = $region60
        $region59: #{tpu_custom_call.1} parent=55 // pred_region
          %s362 = sand.u32 %s133, 1
          %s363 = scalar_lea.sflag [#allocation5], %s362
          %s364 = sand.u32 %s133, 1
          %s365 = smul.addr %s364, 8
          %s366 = scalar_lea.vmem [#allocation8], %s365
          %367 = dma.done %s363, 128
        $region60: #{tpu_custom_call.1} parent=55 // pred_fallthru
          _
      $region56: #{tpu_custom_call.1} parent=5 // pred_fallthru
        _
    $region6: #{tpu_custom_call.1} parent=1 // loop_footer
      %s20 = sadd.s32 1, %s16
    $region7: #{tpu_custom_call.1} parent=1 // loop_footer_branch
      %15 = sbr.rel target = $region3
    $region8: #{tpu_custom_call.1} parent=1 // loop_exit
      _
    %368 = vsyncpa [#allocation4], 1
    %s369 = scalar_lea.sflag [#allocation4], 1
    %370 = vsyncpa %s369, 1
    %371 = vsyncpa [#allocation7], 1
    %372 = vsyncpa [#allocation5], 1
    %s373 = scalar_lea.sflag [#allocation5], 1
    %374 = vsyncpa %s373, 1

</llo_original>
